<compile_context>
chip_gen: v6e
topology: v6e:2x2x1
jax: 0.10.0
libtpu: 0.0.40
codegen_flags: <defaults>
</compile_context>

<pallas_src>
import functools
import math

import jax
import jax.numpy as jnp
from jax import lax
from jax.experimental import pallas as pl
from jax.experimental.pallas import tpu as pltpu


# ----------------------------------------------------------------------------
# Per-generation VMEM budgets.
# ----------------------------------------------------------------------------
def _vmem_budget_and_limit():
    """(accounted-buffer budget, scoped vmem_limit_bytes) for this chip."""
    cap = 64 * 1024 * 1024  # conservative default = v7x per-TensorCore VMEM
    try:
        info = pltpu.get_tpu_info()
        cap = getattr(info, "vmem_capacity_bytes", cap) or cap
    except Exception:
        pass
    if cap >= 96 * 1024 * 1024:          # v5e / v6e: 128 MiB physical
        return 32 * 1024 * 1024, 96 * 1024 * 1024
    return 16 * 1024 * 1024, 48 * 1024 * 1024   # v7x: 64 MiB physical


def _pick_d_tile(d, bytes_fn, budget):
    """Largest D tile (multiple of 128 dividing D, or full D) fitting budget."""
    if bytes_fn(d) <= budget or d % 128 != 0:
        # TODO(synk): D not a multiple of 128 falls back to one full-D block
        # (masked lane stores); wrapper-side padding costs an extra HBM copy.
        return d
    best = 128
    m = d // 128
    for k in range(1, m + 1):
        if m % k == 0 and bytes_fn(128 * k) <= budget:
            best = 128 * k
    return best


def _pick_group_block(num_groups, bytes_fn, budget):
    """Largest divisor of num_groups fitting budget, capped to >=2 grid steps."""
    gb = 1
    for cand in range(1, num_groups + 1):
        if num_groups % cand == 0 and bytes_fn(cand) <= budget:
            gb = cand
    # Keep at least 2 steps on the parallel group axis so both v7x TensorCores
    # (and megacore on other parts) get work; costs ~0.35 us elsewhere.
    gb = min(gb, max(1, num_groups // 2))
    while num_groups % gb != 0:
        gb -= 1
    return max(gb, 1)


# ----------------------------------------------------------------------------
# Kernel 1: per-group Gram statistics (S / raw Gram + row mean / row sum).
# ----------------------------------------------------------------------------
def _gram_kernel(z_ref, s_ref, rstat_ref, *, true_d, single_tile):
    """single_tile=True : S = Zc Zc^T directly, rstat = row mean (best numerics).
    single_tile=False: accumulate raw Z Z^T and row sums over D tiles; the tiny
    centering correction S = G - D m m^T happens in the JAX glue."""
    z = z_ref[...].astype(jnp.float32)                      # (Gb, c, td)
    if single_tile:
        m = jnp.sum(z, axis=-1, keepdims=True) * (1.0 / true_d)
        zc = z - m
        s_ref[...] = jnp.einsum("gcd,ged->gce", zc, zc,
                                preferred_element_type=jnp.float32)
        rstat_ref[...] = m
    else:
        k = pl.program_id(1)

        @pl.when(k == 0)
        def _():
            s_ref[...] = jnp.zeros_like(s_ref)
            rstat_ref[...] = jnp.zeros_like(rstat_ref)

        s_ref[...] += jnp.einsum("gcd,ged->gce", z, z,
                                 preferred_element_type=jnp.float32)
        rstat_ref[...] += jnp.sum(z, axis=-1, keepdims=True)


# ----------------------------------------------------------------------------
# Kernel 2: W = wm @ (Z - mean), streamed over (group, D) tiles.
# ----------------------------------------------------------------------------
def _whiten_kernel(wm_ref, mean_ref, z_ref, w_ref, *, compute_dtype):
    z = z_ref[...].astype(jnp.float32)                      # (Gb, c, td)
    zc = (z - mean_ref[...]).astype(compute_dtype)          # bf16 MXU operands for bf16 weights
    w = jnp.einsum("gce,ged->gcd", wm_ref[...], zc,
                   preferred_element_type=jnp.float32)
    w_ref[...] = w.astype(w_ref.dtype)


# ----------------------------------------------------------------------------
# Glue: batched S^{-1/2} via coupled Newton-Schulz (tiny f32 (c,c) matmuls).
# ----------------------------------------------------------------------------
def _inv_sqrt_ns(s, num_iters, ridge=1e-6):
    """S^{-1/2} per group.  Trace-normalized so eigenvalues lie in (0, 1]."""
    # TODO(synk): exact per-group SVD/eigh (the PyTorch path) has no Pallas
    # equivalent; Newton-Schulz matches it to ~1e-5 for non-degenerate S and
    # could be fused into a third tiny Pallas kernel if the glue ever shows up.
    g, c, _ = s.shape
    eye = jnp.eye(c, dtype=jnp.float32)
    tr = jnp.trace(s, axis1=-2, axis2=-1)[:, None, None]       # (g, 1, 1)
    tr = jnp.maximum(tr, jnp.float32(1e-30))
    s = s + (ridge / c) * tr * eye                             # relative ridge (guards rank deficiency)
    tr = tr * (1.0 + ridge)
    y0 = s / tr
    z0 = jnp.broadcast_to(eye, (g, c, c)).astype(jnp.float32)

    def body(_, carry):
        y, z = carry
        t = 1.5 * eye - 0.5 * jnp.einsum("gij,gjk->gik", z, y)
        return (jnp.einsum("gij,gjk->gik", y, t),
                jnp.einsum("gij,gjk->gik", t, z))

    _, z_ns = lax.fori_loop(0, num_iters, body, (y0, z0))
    wm = z_ns * lax.rsqrt(tr)                                  # A^{-1/2}/sqrt(tr) = S^{-1/2}
    return 0.5 * (wm + jnp.swapaxes(wm, -1, -2))               # re-symmetrize


# ----------------------------------------------------------------------------
# Wrapper.
# ----------------------------------------------------------------------------
@functools.partial(jax.jit, static_argnames=("norm_groups", "ns_iters"))
def own_norm(weight, norm_groups=1, ns_iters=12):
    """JAX/Pallas equivalent of OWNNorm.forward(weight)."""
    c_out = weight.shape[0]
    assert c_out % norm_groups == 0
    g = norm_groups
    c = c_out // g
    d = math.prod(weight.shape[1:])

    z = weight.reshape(g, c, d)                    # native dtype; casts in-kernel
    itemsize = jnp.dtype(weight.dtype).itemsize
    compute_dtype = jnp.bfloat16 if weight.dtype == jnp.bfloat16 else jnp.float32
    cbytes = jnp.dtype(compute_dtype).itemsize

    budget, vmem_limit = _vmem_budget_and_limit()

    # --- per-kernel VMEM accounting (includes f32 intermediates + dbl buffer) -
    def k1_bytes(gb, td):
        return gb * (2 * c * td * itemsize         # z in (double buffered)
                     + 2 * c * td * 4              # f32 copy of z + headroom
                     + 3 * c * c * 4               # Gram accumulator / output
                     + 4 * c * 4)                  # row-sum / mean output

    def k2_bytes(gb, td):
        return gb * (2 * c * td * itemsize         # z in (double buffered)
                     + 2 * c * td * itemsize       # W out (double buffered)
                     + c * td * 4                  # f32 centered copy
                     + c * td * cbytes             # compute-dtype operand
                     + c * td * 4                  # f32 matmul result
                     + 2 * c * c * cbytes          # wm in
                     + 2 * c * 4)                  # mean in

    td1 = _pick_d_tile(d, lambda td: k1_bytes(1, td), budget)
    td2 = _pick_d_tile(d, lambda td: k2_bytes(1, td), budget)
    gb1 = _pick_group_block(g, lambda gb: k1_bytes(gb, td1), budget)
    gb2 = _pick_group_block(g, lambda gb: k2_bytes(gb, td2), budget)
    n_dt1, n_dt2 = d // td1, d // td2
    single_tile = n_dt1 == 1

    # ---- kernel 1: per-group Gram statistics (no Zc written to HBM) --------
    s_or_gram, rstat = pl.pallas_call(
        functools.partial(_gram_kernel, true_d=d, single_tile=single_tile),
        out_shape=(jax.ShapeDtypeStruct((g, c, c), jnp.float32),
                   jax.ShapeDtypeStruct((g, c, 1), jnp.float32)),
        grid=(g // gb1, n_dt1),
        in_specs=[pl.BlockSpec((gb1, c, td1), lambda gi, di: (gi, 0, di))],
        out_specs=(pl.BlockSpec((gb1, c, c), lambda gi, di: (gi, 0, 0)),
                   pl.BlockSpec((gb1, c, 1), lambda gi, di: (gi, 0, 0))),
        compiler_params=pltpu.CompilerParams(
            dimension_semantics=("parallel", "arbitrary"),
            vmem_limit_bytes=vmem_limit),
    )(z)

    if single_tile:
        s_mat, mean = s_or_gram, rstat
    else:
        mean = rstat * jnp.float32(1.0 / d)
        # Zc Zc^T = Z Z^T - D m m^T   (tiny (G,c,c) correction in plain JAX)
        s_mat = s_or_gram - (mean * jnp.swapaxes(mean, -1, -2)) * jnp.float32(d)

    # ---- glue: batched Newton-Schulz S^{-1/2} (replaces jnp.linalg.eigh) ----
    wm = _inv_sqrt_ns(s_mat, ns_iters).astype(compute_dtype)

    # ---- kernel 2: W = wm @ (Z - mean), written once in the weight dtype ----
    w = pl.pallas_call(
        functools.partial(_whiten_kernel, compute_dtype=compute_dtype),
        out_shape=jax.ShapeDtypeStruct((g, c, d), weight.dtype),
        grid=(g // gb2, n_dt2),
        in_specs=[
            pl.BlockSpec((gb2, c, c), lambda gi, di: (gi, 0, 0)),
            pl.BlockSpec((gb2, c, 1), lambda gi, di: (gi, 0, 0)),
            pl.BlockSpec((gb2, c, td2), lambda gi, di: (gi, 0, di)),
        ],
        out_specs=pl.BlockSpec((gb2, c, td2), lambda gi, di: (gi, 0, di)),
        compiler_params=pltpu.CompilerParams(
            dimension_semantics=("parallel", "parallel"),
            vmem_limit_bytes=vmem_limit),
    )(wm, mean, z)

    return w.reshape(weight.shape)


# ----------------------------------------------------------------------------
# Pure-JAX reference (exact eigh path, mirrors the PyTorch forward).
# ----------------------------------------------------------------------------
def _own_norm_ref(weight, norm_groups=1):
    c_out = weight.shape[0]
    c = c_out // norm_groups
    z = weight.reshape(norm_groups, c, -1).astype(jnp.float32)
    zc = z - jnp.mean(z, axis=-1, keepdims=True)
    s = jnp.einsum("gcd,ged->gce", zc, zc)
    eigvals, u = jnp.linalg.eigh(s)
    eigvals = jnp.maximum(eigvals, 1e-12)
    wm = jnp.einsum("gij,gj,gkj->gik", u, lax.rsqrt(eigvals), u)
    w = jnp.einsum("gce,ged->gcd", wm, zc)
    return w.reshape(weight.shape).astype(weight.dtype)


if __name__ == "__main__":
    key = jax.random.PRNGKey(0)

    # Case 1: f32 conv weight (C_out=8, C_in=4, kH=3, kW=3), norm_groups=2.
    weight = jax.random.normal(key, (8, 4, 3, 3), dtype=jnp.float32)
    out = jax.block_until_ready(own_norm(weight, norm_groups=2))
    ref = _own_norm_ref(weight, norm_groups=2)
    assert out.shape == weight.shape and out.dtype == weight.dtype
    assert jnp.allclose(out, ref, rtol=1e-3, atol=1e-3), "f32 mismatch vs reference"

    # Case 2: bf16 weight exercises the bf16-MXU whiten path, checked vs f32 ref.
    w_bf16 = jax.random.normal(key, (16, 8, 3, 3), dtype=jnp.float32).astype(jnp.bfloat16)
    out_bf16 = jax.block_until_ready(own_norm(w_bf16, norm_groups=4))
    ref_bf16 = _own_norm_ref(w_bf16, norm_groups=4).astype(jnp.float32)
    assert out_bf16.shape == w_bf16.shape and out_bf16.dtype == jnp.bfloat16
    assert bool(jnp.all(jnp.isfinite(out_bf16.astype(jnp.float32))))
    assert jnp.allclose(out_bf16.astype(jnp.float32), ref_bf16, rtol=2e-2, atol=2e-2), \
        "bf16 mismatch vs reference"

    print("KERNEL_OK")
</pallas_src>

<mosaic_0001>
module attributes {stable_mosaic.version = 11 : i64} {
  func.func @_gram_kernel(%arg0: i32, %arg1: i32, %arg2: memref<1x4x36xf32, #tpu.memory_space<vmem>>, %arg3: memref<1x4x4xf32, #tpu.memory_space<vmem>>, %arg4: memref<1x4x1xf32, #tpu.memory_space<vmem>>) attributes {dimension_semantics = [#tpu.dimension_semantics<parallel>, #tpu.dimension_semantics<arbitrary>], iteration_bounds = array<i64: 2, 1>, scalar_prefetch = 0 : i64, scratch_operands = 0 : i64, tpu.core_type = #tpu.core_type<tc>, window_params = [{transform_indices = @transform_0, window_bounds = array<i64: 1, 4, 36>}, {transform_indices = @transform_1, window_bounds = array<i64: 1, 4, 4>}, {transform_indices = @transform_2, window_bounds = array<i64: 1, 4, 1>}]} {
    %c0 = arith.constant 0 : index
    %c0_0 = arith.constant 0 : index
    %c0_1 = arith.constant 0 : index
    %0 = vector.load %arg2[%c0, %c0_0, %c0_1] : memref<1x4x36xf32, #tpu.memory_space<vmem>>, vector<1x4x36xf32>
    %cst = arith.constant dense<0.000000e+00> : vector<1x4xf32>
    %1 = vector.multi_reduction <add>, %0, %cst [2] : vector<1x4x36xf32> to vector<1x4xf32>
    %2 = vector.shape_cast %1 : vector<1x4xf32> to vector<1x4x1xf32>
    %cst_2 = arith.constant 0.027777778 : f32
    %3 = vector.broadcast %cst_2 : f32 to vector<1x4x1xf32>
    %4 = arith.mulf %2, %3 : vector<1x4x1xf32>
    %5 = vector.broadcast %4 : vector<1x4x1xf32> to vector<1x4x36xf32>
    %6 = arith.subf %0, %5 : vector<1x4x36xf32>
    "tpu.trace_start"() <{level = 10 : i32, message = "gcd,ged->gce"}> : () -> ()
    %cst_3 = arith.constant dense<0.000000e+00> : vector<1x4x4xf32>
    %7 = tpu.matmul %6, %6, %cst_3 {dimension_numbers = #tpu.dot_dimension_numbers<[2], [2], [1], [1], [0, 0, 0, 1, 1, 1], [0], [0]>} : vector<1x4x36xf32>, vector<1x4x36xf32>, vector<1x4x4xf32> -> vector<1x4x4xf32>
    "tpu.trace_stop"() : () -> ()
    %c0_4 = arith.constant 0 : index
    %c0_5 = arith.constant 0 : index
    %c0_6 = arith.constant 0 : index
    %8 = vector.load %arg3[%c0_4, %c0_5, %c0_6] : memref<1x4x4xf32, #tpu.memory_space<vmem>>, vector<1x4x4xf32>
    tpu.vector_store %arg3[%c0_4, %c0_5, %c0_6], %7 {strides = array<i32>} : memref<1x4x4xf32, #tpu.memory_space<vmem>>, vector<1x4x4xf32>,
    %c0_7 = arith.constant 0 : index
    %c0_8 = arith.constant 0 : index
    %c0_9 = arith.constant 0 : index
    %9 = vector.load %arg4[%c0_7, %c0_8, %c0_9] : memref<1x4x1xf32, #tpu.memory_space<vmem>>, vector<1x4x1xf32>
    tpu.vector_store %arg4[%c0_7, %c0_8, %c0_9], %4 {strides = array<i32>} : memref<1x4x1xf32, #tpu.memory_space<vmem>>, vector<1x4x1xf32>,
    return
  }
  func.func @transform_0(%arg0: i32, %arg1: i32) -> (i32, i32, i32) {
    %c0_i32 = arith.constant 0 : i32
    %c0_i32_0 = arith.constant 0 : i32
    return %arg0, %c0_i32, %arg1 : i32, i32, i32
  }
  func.func @transform_1(%arg0: i32, %arg1: i32) -> (i32, i32, i32) {
    %c0_i32 = arith.constant 0 : i32
    %c0_i32_0 = arith.constant 0 : i32
    %c0_i32_1 = arith.constant 0 : i32
    return %arg0, %c0_i32, %c0_i32_0 : i32, i32, i32
  }
  func.func @transform_2(%arg0: i32, %arg1: i32) -> (i32, i32, i32) {
    %c0_i32 = arith.constant 0 : i32
    %c0_i32_0 = arith.constant 0 : i32
    %c0_i32_1 = arith.constant 0 : i32
    return %arg0, %c0_i32, %c0_i32_0 : i32, i32, i32
  }
}

module attributes {stable_mosaic.version = 11 : i64} {
  func.func @_whiten_kernel(%arg0: i32, %arg1: i32, %arg2: memref<1x4x4xf32, #tpu.memory_space<vmem>>, %arg3: memref<1x4x1xf32, #tpu.memory_space<vmem>>, %arg4: memref<1x4x36xf32, #tpu.memory_space<vmem>>, %arg5: memref<1x4x36xf32, #tpu.memory_space<vmem>>) attributes {dimension_semantics = [#tpu.dimension_semantics<parallel>, #tpu.dimension_semantics<parallel>], iteration_bounds = array<i64: 2, 1>, scalar_prefetch = 0 : i64, scratch_operands = 0 : i64, tpu.core_type = #tpu.core_type<tc>, window_params = [{transform_indices = @transform_0, window_bounds = array<i64: 1, 4, 4>}, {transform_indices = @transform_1, window_bounds = array<i64: 1, 4, 1>}, {transform_indices = @transform_2, window_bounds = array<i64: 1, 4, 36>}, {transform_indices = @transform_3, window_bounds = array<i64: 1, 4, 36>}]} {
    %c0 = arith.constant 0 : index
    %c0_0 = arith.constant 0 : index
    %c0_1 = arith.constant 0 : index
    %0 = vector.load %arg4[%c0, %c0_0, %c0_1] : memref<1x4x36xf32, #tpu.memory_space<vmem>>, vector<1x4x36xf32>
    %c0_2 = arith.constant 0 : index
    %c0_3 = arith.constant 0 : index
    %c0_4 = arith.constant 0 : index
    %1 = vector.load %arg3[%c0_2, %c0_3, %c0_4] : memref<1x4x1xf32, #tpu.memory_space<vmem>>, vector<1x4x1xf32>
    %2 = vector.broadcast %1 : vector<1x4x1xf32> to vector<1x4x36xf32>
    %3 = arith.subf %0, %2 : vector<1x4x36xf32>
    %c0_5 = arith.constant 0 : index
    %c0_6 = arith.constant 0 : index
    %c0_7 = arith.constant 0 : index
    %4 = vector.load %arg2[%c0_5, %c0_6, %c0_7] : memref<1x4x4xf32, #tpu.memory_space<vmem>>, vector<1x4x4xf32>
    "tpu.trace_start"() <{level = 10 : i32, message = "gce,ged->gcd"}> : () -> ()
    %cst = arith.constant dense<0.000000e+00> : vector<1x4x36xf32>
    %5 = tpu.matmul %4, %3, %cst {dimension_numbers = #tpu.dot_dimension_numbers<[2], [1], [1], [2], [0, 0, 0, 1, 1, 2], [0], [0]>} : vector<1x4x4xf32>, vector<1x4x36xf32>, vector<1x4x36xf32> -> vector<1x4x36xf32>
    "tpu.trace_stop"() : () -> ()
    %c0_8 = arith.constant 0 : index
    %c0_9 = arith.constant 0 : index
    %c0_10 = arith.constant 0 : index
    %6 = vector.load %arg5[%c0_8, %c0_9, %c0_10] : memref<1x4x36xf32, #tpu.memory_space<vmem>>, vector<1x4x36xf32>
    tpu.vector_store %arg5[%c0_8, %c0_9, %c0_10], %5 {strides = array<i32>} : memref<1x4x36xf32, #tpu.memory_space<vmem>>, vector<1x4x36xf32>,
    return
  }
  func.func @transform_0(%arg0: i32, %arg1: i32) -> (i32, i32, i32) {
    %c0_i32 = arith.constant 0 : i32
    %c0_i32_0 = arith.constant 0 : i32
    %c0_i32_1 = arith.constant 0 : i32
    return %arg0, %c0_i32, %c0_i32_0 : i32, i32, i32
  }
  func.func @transform_1(%arg0: i32, %arg1: i32) -> (i32, i32, i32) {
    %c0_i32 = arith.constant 0 : i32
    %c0_i32_0 = arith.constant 0 : i32
    %c0_i32_1 = arith.constant 0 : i32
    return %arg0, %c0_i32, %c0_i32_0 : i32, i32, i32
  }
  func.func @transform_2(%arg0: i32, %arg1: i32) -> (i32, i32, i32) {
    %c0_i32 = arith.constant 0 : i32
    %c0_i32_0 = arith.constant 0 : i32
    return %arg0, %c0_i32, %arg1 : i32, i32, i32
  }
  func.func @transform_3(%arg0: i32, %arg1: i32) -> (i32, i32, i32) {
    %c0_i32 = arith.constant 0 : i32
    %c0_i32_0 = arith.constant 0 : i32
    return %arg0, %c0_i32, %arg1 : i32, i32, i32
  }
}

</mosaic_0001>

<llo_original>
// kernel: mul.28
$region0: #{mul.28}
  #allocation0 [shape = 's32[1]{0}', space=sflag, size = 0x4, scoped, tag = 'scoped memory for mul.28']
  %s0 = inlined_call_operand.vmem [shape: f32[4,4], index: 0, kind: input, shape index: {}]
  %s1 = inlined_call_operand.vmem [shape: f32[2,4,4], index: 1, kind: output, shape index: {}]
  // Predicated region
  $region2: #{mul.28} parent=0 // pred_check
    _
  $region3: #{mul.28} parent=0 // pred_check_branch
    %3 = sbr.rel (0) target = $region5
  $region4: #{mul.28} parent=0 // pred_region
    _
  $region5: #{mul.28} parent=0 // pred_fallthru
    _
  %v4 = vld [vmem:[%s0] sm:$0xf]
  %5 = vst [vmem:[%s1] sm:$0xf] %v4
  %s6 = scalar_lea.vmem %s1, 4
  %7 = vst [vmem:[%s6] sm:$0xf] %v4

// kernel: own_norm.3
$region0: #{own_norm.3}
  #allocation0 [shape = 'u32[]', space=smem, size = 0x4, offset = 0x4, fixed_abs, tag = 'smem constant byte address 0x4 - core index']
  #allocation1 [shape = 'u32[144,128]{1,0:T(1,128)}', space=vmem, size = 0x12000, scoped, tag = 'internal scratch']
  %s0 = inlined_call_operand.vmem [shape: f32[2,4,4], index: 0, kind: input, shape index: {}]
  %s1 = inlined_call_operand.vmem [shape: f32[2,4,1], index: 1, kind: input, shape index: {}]
  %s2 = inlined_call_operand.vmem [shape: f32[2,4,36], index: 2, kind: input, shape index: {}]
  %s3 = inlined_call_operand.vmem [shape: f32[2,4,36], index: 3, kind: output, shape index: {}]
  %s4 = sld [smem:[#allocation0]]
  $region45: #{own_norm.3} parent=0
    _
  %s6 = ssub.s32 1, %s4
  %s7 = scalar_select 0, %s6, %s4
  loop: start=0, step=1, limit=4
  $region2: #{own_norm.3} parent=0 // loop_pre_header
    _
  $region3: #{own_norm.3} parent=0 // loop_header
    %s9 = sphi 0, %s13
    %p10 = scmp.ge.s32.totalorder %s9, 4
    %s16 = sphi 0, %s28
    %s17 = sphi 0, %s24
    %s18 = sphi 0, %s16
    %s19 = sphi 0, %s17
    %s20 = sphi 0, %s18
    %s21 = sphi 0, %s19
    %s31 = sphi 0, %s33
    %s34 = sphi 0, %s31
    %s35 = sphi 0, %s34
    %s51 = sphi 0, %s35
    %s57 = sphi 0, %s59
    %s60 = sphi 0, %s57
    %s61 = sphi 0, %s60
    %s77 = sphi 0, %s61
    %s85 = sphi 0, %s87
    %s88 = sphi 0, %s85
    %s89 = sphi 0, %s88
    %s105 = sphi 0, %s89
    %s113 = sphi 0, %s115
    %s116 = sphi 0, %s113
    %s117 = sphi 0, %s116
    %s133 = sphi 0, %s117
  $region4: #{own_norm.3} parent=0 // loop_header_branch
    %12 = sbr.rel (%p10) target = $region8
  $region5: #{own_norm.3} parent=0 // loop_body
    %s14 = ssub.s32 %s9, 1
    %s15 = ssub.s32 %s9, 2
    %s22 = sadd.s32 1, %s17
    %p23 = scmp.ge.s32.totalorder %s22, 1
    %s24 = scalar_select %p23, 0, %s22
    %s25 = sadd.s32 1, %s16
    %s26 = scalar_select %p23, %s25, %s16
    %p27 = scmp.ge.s32.totalorder %s26, 2
    %s28 = scalar_select %p27, 0, %s26
    %s29 = ssub.s32 %s16, %s28
    %p30 = scmp.eq.s32.totalorder %s29, 0
    %s32 = sadd.s32 %s31, 1
    %s33 = scalar_select %p30, %s31, %s32
    %p36 = pneg %p30
    %p37 = scmp.eq.s32.totalorder %s9, 1
    %p38 = por %p36, %p37
    %p39 = scmp.ne.s32.totalorder %s31, %s34
    %p40 = scmp.eq.s32.totalorder %s9, 0
    %p41 = por %p39, %p40
    %p42 = scmp.ne.s32.totalorder %s31, %s34
    %p43 = scmp.eq.s32.totalorder %s14, 1
    %p44 = por %p42, %p43
    %p45 = scmp.ne.s32.totalorder %s34, %s35
    %p46 = scmp.eq.s32.totalorder %s14, 0
    %p47 = por %p45, %p46
    %p48 = scmp.ne.s32.totalorder %s34, %s35
    %p49 = scmp.eq.s32.totalorder %s15, 1
    %p50 = por %p48, %p49
    %p52 = scmp.ne.s32.totalorder %s35, %s51
    %p53 = scmp.eq.s32.totalorder %s15, 0
    %p54 = por %p52, %p53
    %s55 = ssub.s32 %s16, %s28
    %p56 = scmp.eq.s32.totalorder %s55, 0
    %s58 = sadd.s32 %s57, 1
    %s59 = scalar_select %p56, %s57, %s58
    %p62 = pneg %p56
    %p63 = scmp.eq.s32.totalorder %s9, 1
    %p64 = por %p62, %p63
    %p65 = scmp.ne.s32.totalorder %s57, %s60
    %p66 = scmp.eq.s32.totalorder %s9, 0
    %p67 = por %p65, %p66
    %p68 = scmp.ne.s32.totalorder %s57, %s60
    %p69 = scmp.eq.s32.totalorder %s14, 1
    %p70 = por %p68, %p69
    %p71 = scmp.ne.s32.totalorder %s60, %s61
    %p72 = scmp.eq.s32.totalorder %s14, 0
    %p73 = por %p71, %p72
    %p74 = scmp.ne.s32.totalorder %s60, %s61
    %p75 = scmp.eq.s32.totalorder %s15, 1
    %p76 = por %p74, %p75
    %p78 = scmp.ne.s32.totalorder %s61, %s77
    %p79 = scmp.eq.s32.totalorder %s15, 0
    %p80 = por %p78, %p79
    %s81 = ssub.s32 %s16, %s28
    %s82 = ssub.s32 %s17, %s24
    %s83 = sor.u32 %s81, %s82
    %p84 = scmp.eq.s32.totalorder %s83, 0
    %s86 = sadd.s32 %s85, 1
    %s87 = scalar_select %p84, %s85, %s86
    %p90 = pneg %p84
    %p91 = scmp.eq.s32.totalorder %s9, 1
    %p92 = por %p90, %p91
    %p93 = scmp.ne.s32.totalorder %s85, %s88
    %p94 = scmp.eq.s32.totalorder %s9, 0
    %p95 = por %p93, %p94
    %p96 = scmp.ne.s32.totalorder %s85, %s88
    %p97 = scmp.eq.s32.totalorder %s14, 1
    %p98 = por %p96, %p97
    %p99 = scmp.ne.s32.totalorder %s88, %s89
    %p100 = scmp.eq.s32.totalorder %s14, 0
    %p101 = por %p99, %p100
    %p102 = scmp.ne.s32.totalorder %s88, %s89
    %p103 = scmp.eq.s32.totalorder %s15, 1
    %p104 = por %p102, %p103
    %p106 = scmp.ne.s32.totalorder %s89, %s105
    %p107 = scmp.eq.s32.totalorder %s15, 0
    %p108 = por %p106, %p107
    %s109 = ssub.s32 %s16, %s28
    %s110 = ssub.s32 %s17, %s24
    %s111 = sor.u32 %s109, %s110
    %p112 = scmp.eq.s32.totalorder %s111, 0
    %s114 = sadd.s32 %s113, 1
    %s115 = scalar_select %p112, %s113, %s114
    %p118 = pneg %p112
    %p119 = scmp.eq.s32.totalorder %s9, 1
    %p120 = por %p118, %p119
    %p121 = scmp.ne.s32.totalorder %s113, %s116
    %p122 = scmp.eq.s32.totalorder %s9, 0
    %p123 = por %p121, %p122
    %p124 = scmp.ne.s32.totalorder %s113, %s116
    %p125 = scmp.eq.s32.totalorder %s14, 1
    %p126 = por %p124, %p125
    %p127 = scmp.ne.s32.totalorder %s116, %s117
    %p128 = scmp.eq.s32.totalorder %s14, 0
    %p129 = por %p127, %p128
    %p130 = scmp.ne.s32.totalorder %s116, %s117
    %p131 = scmp.eq.s32.totalorder %s15, 1
    %p132 = por %p130, %p131
    %p134 = scmp.ne.s32.totalorder %s117, %s133
    %p135 = scmp.eq.s32.totalorder %s15, 0
    %p136 = por %p134, %p135
    %p137 = scmp.le.s32.totalorder 1, %s9
    %p138 = scmp.lt.s32.totalorder %s9, 3
    %p139 = pnand %p137, %p138
    %p140 = pneg %p139
    // Predicated region
    $region9: #{own_norm.3} parent=5 // pred_check
      _
    $region10: #{own_norm.3} parent=5 // pred_check_branch
      %142 = sbr.rel (%p139) target = $region12
    $region11: #{own_norm.3} parent=5 // pred_region
      %s143 = ssub.s32 %s9, 1
    $region12: #{own_norm.3} parent=5 // pred_fallthru
      _
    %p144 = scmp.lt.s32.totalorder %s9, 2
    // Predicated region
    $region13: #{own_norm.3} parent=5 // pred_check
      %p145 = pneg %p144
    $region14: #{own_norm.3} parent=5 // pred_check_branch
      %147 = sbr.rel (%p145) target = $region16
    $region15: #{own_norm.3} parent=5 // pred_region
      // Predicated region
      $region17: #{own_norm.3} parent=15 // pred_check
        %p148 = pneg %p41
      $region18: #{own_norm.3} parent=15 // pred_check_branch
        %150 = sbr.rel (%p148) target = $region20
      $region19: #{own_norm.3} parent=15 // pred_region
        %p151 = scmp.lt.s32.totalorder %s16, 1
        %s152 = scalar_select %p151, %s16, 1
        %s153 = smul.addr %s152, 4
        %s154 = scalar_lea.vmem %s0, %s153
      $region20: #{own_norm.3} parent=15 // pred_fallthru
        _
      // Predicated region
      $region21: #{own_norm.3} parent=15 // pred_check
        %p155 = pneg %p67
      $region22: #{own_norm.3} parent=15 // pred_check_branch
        %157 = sbr.rel (%p155) target = $region24
      $region23: #{own_norm.3} parent=15 // pred_region
        %p158 = scmp.lt.s32.totalorder %s16, 1
        %s159 = scalar_select %p158, %s16, 1
        %s160 = smul.addr %s159, 4
        %s161 = scalar_lea.vmem %s1, %s160
      $region24: #{own_norm.3} parent=15 // pred_fallthru
        _
      // Predicated region
      $region25: #{own_norm.3} parent=15 // pred_check
        %p162 = pneg %p95
      $region26: #{own_norm.3} parent=15 // pred_check_branch
        %164 = sbr.rel (%p162) target = $region28
      $region27: #{own_norm.3} parent=15 // pred_region
        %p165 = scmp.lt.s32.totalorder %s16, 1
        %s166 = scalar_select %p165, %s16, 1
        %p167 = scmp.lt.s32.totalorder %s17, 0
        %s168 = scalar_select %p167, %s17, 0
        %s169 = sadd.s32 %s168, %s166
        %s170 = smul.addr %s169, 4
        %s171 = scalar_lea.vmem %s2, %s170
      $region28: #{own_norm.3} parent=15 // pred_fallthru
        _
    $region16: #{own_norm.3} parent=5 // pred_fallthru
      _
    %p172 = scmp.le.s32.totalorder 1, %s9
    %p173 = scmp.lt.s32.totalorder %s9, 3
    %p174 = pnand %p172, %p173
    %p175 = pneg %p174
    // Predicated region
    $region29: #{own_norm.3} parent=5 // pred_check
      _
    $region30: #{own_norm.3} parent=5 // pred_check_branch
      %177 = sbr.rel (%p174) target = $region32
    $region31: #{own_norm.3} parent=5 // pred_region
      %s178 = ssub.s32 %s9, 1
      %p179 = scmp.lt.s32.totalorder %s18, 1
      %s180 = scalar_select %p179, %s18, 1
      %s181 = smul.addr %s180, 4
      %s182 = scalar_lea.vmem %s0, %s181
      %p183 = pneg %p47
      %p184 = pneg %p44
      %p185 = scmp.lt.s32.totalorder %s18, 1
      %s186 = scalar_select %p185, %s18, 1
      %s187 = smul.addr %s186, 4
      %s188 = scalar_lea.vmem %s1, %s187
      %p189 = pneg %p73
      %p190 = pneg %p70
      %p191 = scmp.lt.s32.totalorder %s18, 1
      %s192 = scalar_select %p191, %s18, 1
      %p193 = scmp.lt.s32.totalorder %s19, 0
      %s194 = scalar_select %p193, %s19, 0
      %s195 = sadd.s32 %s194, %s192
      %s196 = smul.addr %s195, 4
      %s197 = scalar_lea.vmem %s2, %s196
      %p198 = pneg %p101
      %p199 = pneg %p98
      %p200 = pneg %p129
      %p201 = pneg %p126
      %p202 = scmp.lt.s32.totalorder %s18, 1
      %s203 = scalar_select %p202, %s18, 1
      %p204 = scmp.lt.s32.totalorder %s19, 0
      %s205 = scalar_select %p204, %s19, 0
      %s206 = sadd.s32 %s205, %s203
      %s207 = smul.addr %s206, 4
      %s208 = scalar_lea.vmem %s3, %s207
      %p209 = scmp.lt.s32.totalorder %s18, 1
      %s210 = scalar_select %p209, %s18, 1
      %s211 = smul.addr %s210, 4
      %s212 = scalar_lea.vmem %s0, %s211
      %p213 = scmp.lt.s32.totalorder %s18, 1
      %s214 = scalar_select %p213, %s18, 1
      %s215 = smul.addr %s214, 4
      %s216 = scalar_lea.vmem %s1, %s215
      %p217 = scmp.lt.s32.totalorder %s18, 1
      %s218 = scalar_select %p217, %s18, 1
      %p219 = scmp.lt.s32.totalorder %s19, 0
      %s220 = scalar_select %p219, %s19, 0
      %s221 = sadd.s32 %s220, %s218
      %s222 = smul.addr %s221, 4
      %s223 = scalar_lea.vmem %s2, %s222
      %p224 = scmp.lt.s32.totalorder %s18, 1
      %s225 = scalar_select %p224, %s18, 1
      %p226 = scmp.lt.s32.totalorder %s19, 0
      %s227 = scalar_select %p226, %s19, 0
      %s228 = sadd.s32 %s227, %s225
      %s229 = smul.addr %s228, 4
      %s230 = scalar_lea.vmem %s3, %s229
      %v231 = vld [vmem:[%s223] sm:$0xf]
      %v232 = vld [vmem:[%s216] sm:$0xf]
      %234 = vset.pattern.permute.xlu0 0
      %235 = vperm.xlu0 %234, %v232
      %v236 = vpop.permute.xlu0 %235
      %v238 = vsub.f32 %v231, %v236
      %v239 = vld [vmem:[%s212] sm:$0xf]
      %vm240 = vcmask 31744
      %v242 = vsel %vm240, %v239, 0
      %vm244 = vcmask 1043456
      %v246 = vsel %vm244, %v238, 0
      %248 = vmatprep.subr.mxu0 0.0
      %249 = vmatpush1.msra.mxu0 0.0
      %250 = vmatprep.subr.mxu0 0.0
      %251 = vmatpush1.msra.mxu0 0.0
      %252 = vmatprep.subr.mxu0 0.0
      %253 = vmatpush1.msra.mxu0 0.0
      %254 = vmatprep.subr.mxu0 0.0
      %255 = vmatpush1.msra.mxu0 0.0
      %256 = vmatprep.subr.mxu0 0.0
      %257 = vmatpush1.msra.mxu0 0.0
      %258 = vmatprep.subr.mxu0 0.0
      %259 = vmatpush1.msra.mxu0 0.0
      %260 = vmatprep.subr.mxu0 0.0
      %261 = vmatpush1.msra.mxu0 0.0
      %262 = vmatprep.subr.mxu0 0.0
      %263 = vmatpush1.msra.mxu0 0.0
      %264 = vmatprep.subr.mxu0 0.0
      %265 = vmatpush1.msra.mxu0 0.0
      %266 = vmatprep.subr.mxu0 0.0
      %267 = vmatpush1.msra.mxu0 0.0
      %268 = vmatprep.subr.mxu0 0.0
      %269 = vmatpush1.msra.mxu0 0.0
      %270 = vmatprep.subr.mxu0 0.0
      %271 = vmatpush1.msra.mxu0 0.0
      %272 = vmatprep.subr.mxu0 0.0
      %273 = vmatpush1.msra.mxu0 0.0
      %274 = vmatprep.subr.mxu0 0.0
      %275 = vmatpush1.msra.mxu0 0.0
      %276 = vmatprep.subr.mxu0 0.0
      %277 = vmatpush1.msra.mxu0 0.0
      %278 = vmatprep.subr.mxu0 0.0
      %279 = vmatpush1.msra.mxu0 %v246
      %280 = vmatprep.subr.mxu0 0.0
      %281 = vmatpush2.msra.mxu0 0.0
      %282 = vmatprep.subr.mxu0 0.0
      %283 = vmatpush2.msra.mxu0 0.0
      %284 = vmatprep.subr.mxu0 0.0
      %285 = vmatpush2.msra.mxu0 0.0
      %286 = vmatprep.subr.mxu0 0.0
      %287 = vmatpush2.msra.mxu0 0.0
      %288 = vmatprep.subr.mxu0 0.0
      %289 = vmatpush2.msra.mxu0 0.0
      %290 = vmatprep.subr.mxu0 0.0
      %291 = vmatpush2.msra.mxu0 0.0
      %292 = vmatprep.subr.mxu0 0.0
      %293 = vmatpush2.msra.mxu0 0.0
      %294 = vmatprep.subr.mxu0 0.0
      %295 = vmatpush2.msra.mxu0 0.0
      %296 = vmatprep.subr.mxu0 0.0
      %297 = vmatpush2.msra.mxu0 0.0
      %298 = vmatprep.subr.mxu0 0.0
      %299 = vmatpush2.msra.mxu0 0.0
      %300 = vmatprep.subr.mxu0 0.0
      %301 = vmatpush2.msra.mxu0 0.0
      %302 = vmatprep.subr.mxu0 0.0
      %303 = vmatpush2.msra.mxu0 0.0
      %304 = vmatprep.subr.mxu0 0.0
      %305 = vmatpush2.msra.mxu0 0.0
      %306 = vmatprep.subr.mxu0 0.0
      %307 = vmatpush2.msra.mxu0 0.0
      %308 = vmatprep.subr.mxu0 0.0
      %309 = vmatpush2.msra.mxu0 0.0
      %310 = vmatprep.subr.mxu0 0.0
      %311 = vmatpush2.msra.mxu0 0.0
      %312 = vmatprep.mubr.f32.mxu0 0.0
      %313 = vmatmul.mubr.f32.gmra.mxu0 %v242
      %v314 = vpop.f32.mrf.mxu0
      %v315 = vadd.f32 0.0, %v314
      %v316 = vpop.f32.mrf.mxu0
      %317 = vdwg.mxu0
      %vm318 = vcmask 289792
      %319 = vst.msk [vmem:[%s230] sm:$0xf] %vm318, %v315
      %p320 = scmp.lt.s32.totalorder %s18, 1
      %s321 = scalar_select %p320, %s18, 1
      %p322 = scmp.lt.s32.totalorder %s19, 0
      %s323 = scalar_select %p322, %s19, 0
      %s324 = sadd.s32 %s323, %s321
      %s325 = smul.addr %s324, 4
      %s326 = scalar_lea.vmem %s3, %s325
      // Predicated region
      $region33: #{own_norm.3} parent=31 // pred_check
        %p327 = pneg %p126
      $region34: #{own_norm.3} parent=31 // pred_check_branch
        %329 = sbr.rel (%p327) target = $region36
      $region35: #{own_norm.3} parent=31 // pred_region
        _
      $region36: #{own_norm.3} parent=31 // pred_fallthru
        _
    $region32: #{own_norm.3} parent=5 // pred_fallthru
      _
    %p330 = scmp.le.s32.totalorder 2, %s9
    // Predicated region
    $region37: #{own_norm.3} parent=5 // pred_check
      %p331 = pneg %p330
    $region38: #{own_norm.3} parent=5 // pred_check_branch
      %333 = sbr.rel (%p331) target = $region40
    $region39: #{own_norm.3} parent=5 // pred_region
      %s334 = ssub.s32 %s9, 2
      // Predicated region
      $region41: #{own_norm.3} parent=39 // pred_check
        %p335 = pneg %p132
      $region42: #{own_norm.3} parent=39 // pred_check_branch
        %337 = sbr.rel (%p335) target = $region44
      $region43: #{own_norm.3} parent=39 // pred_region
        %p338 = scmp.lt.s32.totalorder %s20, 1
        %s339 = scalar_select %p338, %s20, 1
        %p340 = scmp.lt.s32.totalorder %s21, 0
        %s341 = scalar_select %p340, %s21, 0
        %s342 = sadd.s32 %s341, %s339
        %s343 = smul.addr %s342, 4
        %s344 = scalar_lea.vmem %s3, %s343
      $region44: #{own_norm.3} parent=39 // pred_fallthru
        _
    $region40: #{own_norm.3} parent=5 // pred_fallthru
      _
  $region6: #{own_norm.3} parent=0 // loop_footer
    %s13 = sadd.s32 1, %s9
  $region7: #{own_norm.3} parent=0 // loop_footer_branch
    %8 = sbr.rel target = $region3
  $region8: #{own_norm.3} parent=0 // loop_exit
    _

// kernel: own_norm.2
$region0: #{own_norm.2}
  #allocation0 [shape = 'u32[]', space=smem, size = 0x4, offset = 0x4, fixed_abs, tag = 'smem constant byte address 0x4 - core index']
  #allocation1 [shape = 'u32[144,128]{1,0:T(1,128)}', space=vmem, size = 0x12000, scoped, tag = 'internal scratch']
  %s0 = inlined_call_operand.vmem [shape: f32[2,4,36], index: 0, kind: input, shape index: {}]
  %s1 = inlined_call_operand.vmem [shape: f32[2,4,4], index: 1, kind: output, shape index: {0}]
  %s2 = inlined_call_operand.vmem [shape: f32[2,4,1], index: 2, kind: output, shape index: {1}]
  %3 = xla_tuple %s1, %s2
  %s4 = sld [smem:[#allocation0]]
  $region45: #{own_norm.2} parent=0
    _
  %s6 = ssub.s32 1, %s4
  %s7 = scalar_select 0, %s6, %s4
  loop: start=0, step=1, limit=4
  $region2: #{own_norm.2} parent=0 // loop_pre_header
    _
  $region3: #{own_norm.2} parent=0 // loop_header
    %s9 = sphi 0, %s13
    %p10 = scmp.ge.s32.totalorder %s9, 4
    %s16 = sphi 0, %s28
    %s17 = sphi 0, %s24
    %s18 = sphi 0, %s16
    %s19 = sphi 0, %s17
    %s20 = sphi 0, %s18
    %s21 = sphi 0, %s19
    %s33 = sphi 0, %s35
    %s36 = sphi 0, %s33
    %s37 = sphi 0, %s36
    %s53 = sphi 0, %s37
    %s59 = sphi 0, %s61
    %s62 = sphi 0, %s59
    %s63 = sphi 0, %s62
    %s79 = sphi 0, %s63
    %s85 = sphi 0, %s87
    %s88 = sphi 0, %s85
    %s89 = sphi 0, %s88
    %s105 = sphi 0, %s89
  $region4: #{own_norm.2} parent=0 // loop_header_branch
    %12 = sbr.rel (%p10) target = $region8
  $region5: #{own_norm.2} parent=0 // loop_body
    %s14 = ssub.s32 %s9, 1
    %s15 = ssub.s32 %s9, 2
    %s22 = sadd.s32 1, %s17
    %p23 = scmp.ge.s32.totalorder %s22, 1
    %s24 = scalar_select %p23, 0, %s22
    %s25 = sadd.s32 1, %s16
    %s26 = scalar_select %p23, %s25, %s16
    %p27 = scmp.ge.s32.totalorder %s26, 2
    %s28 = scalar_select %p27, 0, %s26
    %s29 = ssub.s32 %s16, %s28
    %s30 = ssub.s32 %s17, %s24
    %s31 = sor.u32 %s29, %s30
    %p32 = scmp.eq.s32.totalorder %s31, 0
    %s34 = sadd.s32 %s33, 1
    %s35 = scalar_select %p32, %s33, %s34
    %p38 = pneg %p32
    %p39 = scmp.eq.s32.totalorder %s9, 1
    %p40 = por %p38, %p39
    %p41 = scmp.ne.s32.totalorder %s33, %s36
    %p42 = scmp.eq.s32.totalorder %s9, 0
    %p43 = por %p41, %p42
    %p44 = scmp.ne.s32.totalorder %s33, %s36
    %p45 = scmp.eq.s32.totalorder %s14, 1
    %p46 = por %p44, %p45
    %p47 = scmp.ne.s32.totalorder %s36, %s37
    %p48 = scmp.eq.s32.totalorder %s14, 0
    %p49 = por %p47, %p48
    %p50 = scmp.ne.s32.totalorder %s36, %s37
    %p51 = scmp.eq.s32.totalorder %s15, 1
    %p52 = por %p50, %p51
    %p54 = scmp.ne.s32.totalorder %s37, %s53
    %p55 = scmp.eq.s32.totalorder %s15, 0
    %p56 = por %p54, %p55
    %s57 = ssub.s32 %s16, %s28
    %p58 = scmp.eq.s32.totalorder %s57, 0
    %s60 = sadd.s32 %s59, 1
    %s61 = scalar_select %p58, %s59, %s60
    %p64 = pneg %p58
    %p65 = scmp.eq.s32.totalorder %s9, 1
    %p66 = por %p64, %p65
    %p67 = scmp.ne.s32.totalorder %s59, %s62
    %p68 = scmp.eq.s32.totalorder %s9, 0
    %p69 = por %p67, %p68
    %p70 = scmp.ne.s32.totalorder %s59, %s62
    %p71 = scmp.eq.s32.totalorder %s14, 1
    %p72 = por %p70, %p71
    %p73 = scmp.ne.s32.totalorder %s62, %s63
    %p74 = scmp.eq.s32.totalorder %s14, 0
    %p75 = por %p73, %p74
    %p76 = scmp.ne.s32.totalorder %s62, %s63
    %p77 = scmp.eq.s32.totalorder %s15, 1
    %p78 = por %p76, %p77
    %p80 = scmp.ne.s32.totalorder %s63, %s79
    %p81 = scmp.eq.s32.totalorder %s15, 0
    %p82 = por %p80, %p81
    %s83 = ssub.s32 %s16, %s28
    %p84 = scmp.eq.s32.totalorder %s83, 0
    %s86 = sadd.s32 %s85, 1
    %s87 = scalar_select %p84, %s85, %s86
    %p90 = pneg %p84
    %p91 = scmp.eq.s32.totalorder %s9, 1
    %p92 = por %p90, %p91
    %p93 = scmp.ne.s32.totalorder %s85, %s88
    %p94 = scmp.eq.s32.totalorder %s9, 0
    %p95 = por %p93, %p94
    %p96 = scmp.ne.s32.totalorder %s85, %s88
    %p97 = scmp.eq.s32.totalorder %s14, 1
    %p98 = por %p96, %p97
    %p99 = scmp.ne.s32.totalorder %s88, %s89
    %p100 = scmp.eq.s32.totalorder %s14, 0
    %p101 = por %p99, %p100
    %p102 = scmp.ne.s32.totalorder %s88, %s89
    %p103 = scmp.eq.s32.totalorder %s15, 1
    %p104 = por %p102, %p103
    %p106 = scmp.ne.s32.totalorder %s89, %s105
    %p107 = scmp.eq.s32.totalorder %s15, 0
    %p108 = por %p106, %p107
    %p109 = scmp.le.s32.totalorder 1, %s9
    %p110 = scmp.lt.s32.totalorder %s9, 3
    %p111 = pnand %p109, %p110
    %p112 = pneg %p111
    // Predicated region
    $region9: #{own_norm.2} parent=5 // pred_check
      _
    $region10: #{own_norm.2} parent=5 // pred_check_branch
      %114 = sbr.rel (%p111) target = $region12
    $region11: #{own_norm.2} parent=5 // pred_region
      %s115 = ssub.s32 %s9, 1
    $region12: #{own_norm.2} parent=5 // pred_fallthru
      _
    %p116 = scmp.lt.s32.totalorder %s9, 2
    // Predicated region
    $region13: #{own_norm.2} parent=5 // pred_check
      %p117 = pneg %p116
    $region14: #{own_norm.2} parent=5 // pred_check_branch
      %119 = sbr.rel (%p117) target = $region16
    $region15: #{own_norm.2} parent=5 // pred_region
      // Predicated region
      $region17: #{own_norm.2} parent=15 // pred_check
        %p120 = pneg %p43
      $region18: #{own_norm.2} parent=15 // pred_check_branch
        %122 = sbr.rel (%p120) target = $region20
      $region19: #{own_norm.2} parent=15 // pred_region
        %p123 = scmp.lt.s32.totalorder %s16, 1
        %s124 = scalar_select %p123, %s16, 1
        %p125 = scmp.lt.s32.totalorder %s17, 0
        %s126 = scalar_select %p125, %s17, 0
        %s127 = sadd.s32 %s126, %s124
        %s128 = smul.addr %s127, 4
        %s129 = scalar_lea.vmem %s0, %s128
      $region20: #{own_norm.2} parent=15 // pred_fallthru
        _
    $region16: #{own_norm.2} parent=5 // pred_fallthru
      _
    %p130 = scmp.le.s32.totalorder 1, %s9
    %p131 = scmp.lt.s32.totalorder %s9, 3
    %p132 = pnand %p130, %p131
    %p133 = pneg %p132
    // Predicated region
    $region21: #{own_norm.2} parent=5 // pred_check
      _
    $region22: #{own_norm.2} parent=5 // pred_check_branch
      %135 = sbr.rel (%p132) target = $region24
    $region23: #{own_norm.2} parent=5 // pred_region
      %s136 = ssub.s32 %s9, 1
      %p137 = scmp.lt.s32.totalorder %s18, 1
      %s138 = scalar_select %p137, %s18, 1
      %p139 = scmp.lt.s32.totalorder %s19, 0
      %s140 = scalar_select %p139, %s19, 0
      %s141 = sadd.s32 %s140, %s138
      %s142 = smul.addr %s141, 4
      %s143 = scalar_lea.vmem %s0, %s142
      %p144 = pneg %p49
      %p145 = pneg %p46
      %p146 = pneg %p75
      %p147 = pneg %p72
      %p148 = scmp.lt.s32.totalorder %s18, 1
      %s149 = scalar_select %p148, %s18, 1
      %s150 = smul.addr %s149, 4
      %s151 = scalar_lea.vmem %s1, %s150
      %p152 = pneg %p101
      %p153 = pneg %p98
      %p154 = scmp.lt.s32.totalorder %s18, 1
      %s155 = scalar_select %p154, %s18, 1
      %s156 = smul.addr %s155, 4
      %s157 = scalar_lea.vmem %s2, %s156
      %p158 = scmp.lt.s32.totalorder %s18, 1
      %s159 = scalar_select %p158, %s18, 1
      %p160 = scmp.lt.s32.totalorder %s19, 0
      %s161 = scalar_select %p160, %s19, 0
      %s162 = sadd.s32 %s161, %s159
      %s163 = smul.addr %s162, 4
      %s164 = scalar_lea.vmem %s0, %s163
      %p165 = scmp.lt.s32.totalorder %s18, 1
      %s166 = scalar_select %p165, %s18, 1
      %s167 = smul.addr %s166, 4
      %s168 = scalar_lea.vmem %s1, %s167
      %p169 = scmp.lt.s32.totalorder %s18, 1
      %s170 = scalar_select %p169, %s18, 1
      %s171 = smul.addr %s170, 4
      %s172 = scalar_lea.vmem %s2, %s171
      %v173 = vld [vmem:[%s164] sm:$0xf]
      %vm174 = vcmask 289792
      %v175 = vsel %vm174, %v173, 0.0
      %176 = vadd.xlane.f32.xlu0 %v175
      %v177 = vpop.xlane.xlu0 %176
      %v178 = vmul.f32 %v177, 0.027777778
      %v179 = vsub.f32 %v173, %v178
      %vm180 = vcmask 293888
      %v182 = vsel %vm180, %v179, 0
      %184 = vmatprep.subr.mxu0 0.0
      %185 = vmatpush1.xpose.msra.mxu0 0.0
      %186 = vmatprep.subr.mxu0 0.0
      %187 = vmatpush1.xpose.msra.mxu0 0.0
      %188 = vmatprep.subr.mxu0 0.0
      %189 = vmatpush1.xpose.msra.mxu0 0.0
      %190 = vmatprep.subr.mxu0 0.0
      %191 = vmatpush1.xpose.msra.mxu0 0.0
      %192 = vmatprep.subr.mxu0 0.0
      %193 = vmatpush1.xpose.msra.mxu0 0.0
      %194 = vmatprep.subr.mxu0 0.0
      %195 = vmatpush1.xpose.msra.mxu0 0.0
      %196 = vmatprep.subr.mxu0 0.0
      %197 = vmatpush1.xpose.msra.mxu0 0.0
      %198 = vmatprep.subr.mxu0 0.0
      %199 = vmatpush1.xpose.msra.mxu0 0.0
      %200 = vmatprep.subr.mxu0 0.0
      %201 = vmatpush1.xpose.msra.mxu0 0.0
      %202 = vmatprep.subr.mxu0 0.0
      %203 = vmatpush1.xpose.msra.mxu0 0.0
      %204 = vmatprep.subr.mxu0 0.0
      %205 = vmatpush1.xpose.msra.mxu0 0.0
      %206 = vmatprep.subr.mxu0 0.0
      %207 = vmatpush1.xpose.msra.mxu0 0.0
      %208 = vmatprep.subr.mxu0 0.0
      %209 = vmatpush1.xpose.msra.mxu0 0.0
      %210 = vmatprep.subr.mxu0 0.0
      %211 = vmatpush1.xpose.msra.mxu0 0.0
      %212 = vmatprep.subr.mxu0 0.0
      %213 = vmatpush1.xpose.msra.mxu0 0.0
      %214 = vmatprep.subr.mxu0 0.0
      %215 = vmatpush1.xpose.msra.mxu0 %v182
      %216 = vmatprep.subr.mxu0 0.0
      %217 = vmatpush2.xpose.msra.mxu0 0.0
      %218 = vmatprep.subr.mxu0 0.0
      %219 = vmatpush2.xpose.msra.mxu0 0.0
      %220 = vmatprep.subr.mxu0 0.0
      %221 = vmatpush2.xpose.msra.mxu0 0.0
      %222 = vmatprep.subr.mxu0 0.0
      %223 = vmatpush2.xpose.msra.mxu0 0.0
      %224 = vmatprep.subr.mxu0 0.0
      %225 = vmatpush2.xpose.msra.mxu0 0.0
      %226 = vmatprep.subr.mxu0 0.0
      %227 = vmatpush2.xpose.msra.mxu0 0.0
      %228 = vmatprep.subr.mxu0 0.0
      %229 = vmatpush2.xpose.msra.mxu0 0.0
      %230 = vmatprep.subr.mxu0 0.0
      %231 = vmatpush2.xpose.msra.mxu0 0.0
      %232 = vmatprep.subr.mxu0 0.0
      %233 = vmatpush2.xpose.msra.mxu0 0.0
      %234 = vmatprep.subr.mxu0 0.0
      %235 = vmatpush2.xpose.msra.mxu0 0.0
      %236 = vmatprep.subr.mxu0 0.0
      %237 = vmatpush2.xpose.msra.mxu0 0.0
      %238 = vmatprep.subr.mxu0 0.0
      %239 = vmatpush2.xpose.msra.mxu0 0.0
      %240 = vmatprep.subr.mxu0 0.0
      %241 = vmatpush2.xpose.msra.mxu0 0.0
      %242 = vmatprep.subr.mxu0 0.0
      %243 = vmatpush2.xpose.msra.mxu0 0.0
      %244 = vmatprep.subr.mxu0 0.0
      %245 = vmatpush2.xpose.msra.mxu0 0.0
      %246 = vmatprep.subr.mxu0 0.0
      %247 = vmatpush2.xpose.msra.mxu0 0.0
      %248 = vmatprep.mubr.f32.mxu0 0.0
      %249 = vmatmul.mubr.f32.gmra.mxu0 %v182
      %v250 = vpop.f32.mrf.mxu0
      %v251 = vadd.f32 0.0, %v250
      %v252 = vpop.f32.mrf.mxu0
      %253 = vdwg.mxu0
      %vm254 = vcmask 27648
      %255 = vst.msk [vmem:[%s168] sm:$0xf] %vm254, %v251
      %vm256 = vcmask 3072
      %257 = vst.msk [vmem:[%s172] sm:$0xf] %vm256, %v178
      %p258 = scmp.lt.s32.totalorder %s18, 1
      %s259 = scalar_select %p258, %s18, 1
      %s260 = smul.addr %s259, 4
      %s261 = scalar_lea.vmem %s1, %s260
      %p262 = scmp.lt.s32.totalorder %s18, 1
      %s263 = scalar_select %p262, %s18, 1
      %s264 = smul.addr %s263, 4
      %s265 = scalar_lea.vmem %s2, %s264
      // Predicated region
      $region25: #{own_norm.2} parent=23 // pred_check
        %p266 = pneg %p72
      $region26: #{own_norm.2} parent=23 // pred_check_branch
        %268 = sbr.rel (%p266) target = $region28
      $region27: #{own_norm.2} parent=23 // pred_region
        _
      $region28: #{own_norm.2} parent=23 // pred_fallthru
        _
      // Predicated region
      $region29: #{own_norm.2} parent=23 // pred_check
        %p269 = pneg %p98
      $region30: #{own_norm.2} parent=23 // pred_check_branch
        %271 = sbr.rel (%p269) target = $region32
      $region31: #{own_norm.2} parent=23 // pred_region
        _
      $region32: #{own_norm.2} parent=23 // pred_fallthru
        _
    $region24: #{own_norm.2} parent=5 // pred_fallthru
      _
    %p272 = scmp.le.s32.totalorder 2, %s9
    // Predicated region
    $region33: #{own_norm.2} parent=5 // pred_check
      %p273 = pneg %p272
    $region34: #{own_norm.2} parent=5 // pred_check_branch
      %275 = sbr.rel (%p273) target = $region36
    $region35: #{own_norm.2} parent=5 // pred_region
      %s276 = ssub.s32 %s9, 2
      // Predicated region
      $region37: #{own_norm.2} parent=35 // pred_check
        %p277 = pneg %p78
      $region38: #{own_norm.2} parent=35 // pred_check_branch
        %279 = sbr.rel (%p277) target = $region40
      $region39: #{own_norm.2} parent=35 // pred_region
        %p280 = scmp.lt.s32.totalorder %s20, 1
        %s281 = scalar_select %p280, %s20, 1
        %s282 = smul.addr %s281, 4
        %s283 = scalar_lea.vmem %s1, %s282
      $region40: #{own_norm.2} parent=35 // pred_fallthru
        _
      // Predicated region
      $region41: #{own_norm.2} parent=35 // pred_check
        %p284 = pneg %p104
      $region42: #{own_norm.2} parent=35 // pred_check_branch
        %286 = sbr.rel (%p284) target = $region44
      $region43: #{own_norm.2} parent=35 // pred_region
        %p287 = scmp.lt.s32.totalorder %s20, 1
        %s288 = scalar_select %p287, %s20, 1
        %s289 = smul.addr %s288, 4
        %s290 = scalar_lea.vmem %s2, %s289
      $region44: #{own_norm.2} parent=35 // pred_fallthru
        _
    $region36: #{own_norm.2} parent=5 // pred_fallthru
      _
  $region6: #{own_norm.2} parent=0 // loop_footer
    %s13 = sadd.s32 1, %s9
  $region7: #{own_norm.2} parent=0 // loop_footer_branch
    %8 = sbr.rel target = $region3
  $region8: #{own_norm.2} parent=0 // loop_exit
    _

</llo_original>
